<compile_context>
chip_gen: v7x
topology: tpu7x:2x2x1
jax: 0.10.0
libtpu: 0.0.40
codegen_flags: <defaults>
</compile_context>

<pallas_src>
import functools
import math

import jax
import jax.numpy as jnp
from jax.experimental import pallas as pl
from jax.experimental.pallas import tpu as pltpu


def _round_up(x, m):
    return ((x + m - 1) // m) * m


def _gmm_nll_kernel(feat_ref, label_ref, out_ref, *, dim, rank, num_components,
                    pis_rows):
    D, R, K = dim, rank, num_components
    KD = K * D
    log2pi = math.log(2.0 * math.pi)

    # sublane offsets of the grouped sections inside `feat` (all 8-aligned)
    o_mu = pis_rows
    o_ld = pis_rows + KD
    o_w = pis_rows + 2 * KD

    label = label_ref[...]                            # [D, Bt]  (batch on lanes)

    def dsum(x):                                      # [D, Bt] -> [1, Bt]
        return jnp.sum(x, axis=0, keepdims=True)

    pis_list = []
    mix_list = []
    for k in range(K):
        pi_k = feat_ref[pl.ds(k, 1), :]               # [1, Bt]
        mu_k = feat_ref[pl.ds(o_mu + k * D, D), :]    # [D, Bt]
        logd_k = feat_ref[pl.ds(o_ld + k * D, D), :]  # [D, Bt]
        dinv_k = jnp.exp(-logd_k)                     # D^{-1}

        diff = label - mu_k
        wd = diff * dinv_k                            # D^{-1} diff
        quad0 = dsum(diff * wd)                       # diff^T D^{-1} diff   [1, Bt]
        sld = dsum(logd_k)                            # log|D_diag|          [1, Bt]

        # W columns are contiguous, 8-aligned sublane slabs (wrapper groups (k,r,d))
        wcols = [feat_ref[pl.ds(o_w + (k * R + r) * D, D), :] for r in range(R)]
        dw = [w * dinv_k for w in wcols]              # D^{-1} W columns (reused)
        q = [dsum(w * wd) for w in wcols]             # W^T D^{-1} diff      [1, Bt]

        # capacitance = I + W^T D^{-1} W (lower triangle)
        cap = [[None] * R for _ in range(R)]
        for i in range(R):
            for j in range(i + 1):
                c = dsum(dw[i] * wcols[j])
                if i == j:
                    c = c + 1.0
                cap[i][j] = c

        # unrolled Cholesky of the RxR capacitance; rsqrt + multiplies (EUP),
        # pivots are >= 1 so rsqrt is numerically safe.
        L = [[None] * R for _ in range(R)]
        Linv = [None] * R
        logdet_cap = None
        for j in range(R):
            s = cap[j][j]
            for t in range(j):
                s = s - L[j][t] * L[j][t]
            inv = jax.lax.rsqrt(s)
            Linv[j] = inv
            L[j][j] = s * inv                         # = sqrt(s)
            ld = jnp.log(s)                           # = log(L_jj^2)
            logdet_cap = ld if logdet_cap is None else logdet_cap + ld
            for i in range(j + 1, R):
                s2 = cap[i][j]
                for t in range(j):
                    s2 = s2 - L[i][t] * L[j][t]
                L[i][j] = s2 * inv

        # forward substitution L y = q ; correction = ||y||^2
        y = [None] * R
        corr = None
        for j in range(R):
            s = q[j]
            for t in range(j):
                s = s - L[j][t] * y[t]
            y[j] = s * Linv[j]
            yy = y[j] * y[j]
            corr = yy if corr is None else corr + yy
        corr = corr if corr is not None else 0.0
        logdet_cap = logdet_cap if logdet_cap is not None else 0.0

        maha = quad0 - corr
        log_det = logdet_cap + sld
        clp = -0.5 * (D * log2pi + log_det + maha)    # component log-prob   [1, Bt]

        pis_list.append(pi_k)
        mix_list.append(pi_k + clp)

    # mixture NLL = lse_K(pis) - lse_K(pis + comp_lp); K is tiny -> fully
    # unrolled on [1, Bt] slabs, no cross-lane reductions at all.
    def lse(xs):
        m = xs[0]
        for x in xs[1:]:
            m = jnp.maximum(m, x)
        s = jnp.exp(xs[0] - m)
        for x in xs[1:]:
            s = s + jnp.exp(x - m)
        return m + jnp.log(s)

    out_ref[...] = lse(pis_list) - lse(mix_list)      # [1, Bt] lane-dense store


def low_rank_gmm_nll(pred, label, *, dim, rank, num_components, block_b=1024):
    """Pallas equivalent of LowRankGMM.forward(pred, label) -> per-sample NLL [B]."""
    B = pred.shape[0]
    D, R, K = dim, rank, num_components
    T = 1 + D + D * R + D
    assert pred.shape == (B, K * T)
    assert label.shape == (B, D)

    KD = K * D
    pis_rows = _round_up(K, 8)            # pad pis so mus/logdiag/W start 8-aligned
    P = pis_rows + 2 * KD + K * R * D

    # ---- batch tiling: batch lives on the LANE axis (Bt is a multiple of 128) ----
    B128 = _round_up(B, 128)
    Bt = max(128, (min(block_b, B128) // 128) * 128)
    if B128 >= 256:
        # guarantee >= 2 grid steps so ("parallel",) shards across both TCs on v7x
        Bt = min(Bt, _round_up(pl.cdiv(B128, 2), 128))
    Bp = _round_up(B128, Bt)              # full blocks only (no partial tiles)
    grid = (Bp // Bt,)

    # ---- single fused XLA pass: cast + deinterleave + transpose + pad ----
    # feat[P, B]: [pis (padded to 8 rows) | mus (k,d) | logdiag (k,d) | W cols (k,r,d)]
    # i.e. exactly the sublane layout the kernel consumes; batch ends up on lanes.
    op = pred.reshape(B, K, T).astype(jnp.float32)
    pis_t = jnp.pad(jnp.transpose(op[:, :, 0], (1, 0)),
                    ((0, pis_rows - K), (0, 0)))                          # [8, B]
    mus_t = jnp.transpose(op[:, :, 1:1 + D], (1, 2, 0)).reshape(KD, B)    # [K*D, B]
    logd_t = jnp.transpose(op[:, :, 1 + D + D * R:], (1, 2, 0)).reshape(KD, B)
    w_t = jnp.transpose(op[:, :, 1 + D:1 + D + D * R].reshape(B, K, D, R),
                        (1, 3, 2, 0)).reshape(K * R * D, B)               # [(k,r,d), B]
    feat = jnp.concatenate([pis_t, mus_t, logd_t, w_t], axis=0)           # [P, B]
    feat = jnp.pad(feat, ((0, 0), (0, Bp - B)))                           # [P, Bp]
    label_t = jnp.pad(label.astype(jnp.float32).T, ((0, 0), (0, Bp - B))) # [D, Bp]

    kernel = functools.partial(_gmm_nll_kernel, dim=D, rank=R,
                               num_components=K, pis_rows=pis_rows)

    out = pl.pallas_call(
        kernel,
        out_shape=jax.ShapeDtypeStruct((1, Bp), jnp.float32),
        grid_spec=pltpu.PrefetchScalarGridSpec(
            num_scalar_prefetch=0,
            grid=grid,
            in_specs=[
                # NOTE: the kernel is now close to HBM-bound; if the feat DMA
                # ever shows up exposed, add pipeline_mode=pl.Buffered(3) here.
                pl.BlockSpec((P, Bt), lambda i: (0, i)),
                pl.BlockSpec((D, Bt), lambda i: (0, i)),
            ],
            out_specs=pl.BlockSpec((1, Bt), lambda i: (0, i)),
        ),
        compiler_params=pltpu.CompilerParams(
            dimension_semantics=("parallel",)),   # megacore sharding on v7x
    )(feat, label_t)

    return out[0, :B]


def reference_nll(pred, label, *, dim, rank, num_components):
    """Pure-JAX reference of the same math (for correctness checking)."""
    B = pred.shape[0]
    D, R, K = dim, rank, num_components
    total = 1 + D + D * R + D
    out_pred = pred.reshape(B, K, total).astype(jnp.float32)
    pis = out_pred[..., 0]
    mus = out_pred[..., 1:1 + D]
    W = out_pred[..., 1 + D:1 + D + D * R].reshape(B, K, D, R)
    logdiag = out_pred[..., 1 + D + D * R:]
    dinv = jnp.exp(-logdiag)

    diff = label.astype(jnp.float32)[:, None, :] - mus                # [B,K,D]
    q = jnp.einsum('bkdr,bkd->bkr', W, dinv * diff)                   # [B,K,R]
    cap = jnp.eye(R, dtype=jnp.float32) + jnp.einsum('bkdi,bkd,bkdj->bkij', W, dinv, W)
    sol = jnp.linalg.solve(cap, q[..., None])[..., 0]
    mahalanobis = jnp.sum(diff * diff * dinv, -1) - jnp.sum(q * sol, -1)
    log_det = jnp.linalg.slogdet(cap)[1] + jnp.sum(logdiag, -1)
    comp_lp = -0.5 * (D * math.log(2.0 * math.pi) + log_det + mahalanobis)
    mix_lp = jax.nn.log_softmax(pis, axis=-1)
    return -jax.scipy.special.logsumexp(mix_lp + comp_lp, axis=-1)


if __name__ == "__main__":
    # module config (small, consistent with LowRankGMM.__init__)
    dim, rank, num_components = 8, 2, 3
    out_dim = (1 + dim + dim * rank + dim) * num_components          # = 99

    key = jax.random.PRNGKey(0)

    # batch=4: single 128-lane tile; batch=260: padded batch + 2 grid steps
    for batch in (4, 260):
        kp, kl, key = jax.random.split(key, 3)
        pred = jax.random.normal(kp, (batch, out_dim), dtype=jnp.float32)
        label = jax.random.normal(kl, (batch, dim), dtype=jnp.float32)

        nll = low_rank_gmm_nll(pred, label, dim=dim, rank=rank,
                               num_components=num_components)
        nll = jax.block_until_ready(nll)

        ref = reference_nll(pred, label, dim=dim, rank=rank,
                            num_components=num_components)
        assert nll.shape == (batch,)
        assert jnp.allclose(nll, ref, rtol=1e-3, atol=1e-3), (batch, nll, ref)

    # TODO(synk): LowRankGMM.sample() (torch.distributions random sampling) is
    # not kernelized; only the forward NLL path is implemented.
    print("KERNEL_OK")
</pallas_src>

<mosaic_0001>
module attributes {stable_mosaic.version = 11 : i64} {
  func.func @_gmm_nll_kernel(%arg0: i32, %arg1: memref<104x128xf32, #tpu.memory_space<vmem>>, %arg2: memref<8x128xf32, #tpu.memory_space<vmem>>, %arg3: memref<1x128xf32, #tpu.memory_space<vmem>>) attributes {dimension_semantics = [#tpu.dimension_semantics<parallel>], iteration_bounds = array<i64: 1>, scalar_prefetch = 0 : i64, scratch_operands = 0 : i64, tpu.core_type = #tpu.core_type<tc>, window_params = [{transform_indices = @transform_0, window_bounds = array<i64: 104, 128>}, {transform_indices = @transform_1, window_bounds = array<i64: 8, 128>}, {transform_indices = @transform_2, window_bounds = array<i64: 1, 128>}]} {
    %c0 = arith.constant 0 : index
    %c0_0 = arith.constant 0 : index
    %0 = vector.load %arg2[%c0, %c0_0] : memref<8x128xf32, #tpu.memory_space<vmem>>, vector<8x128xf32>
    %c0_1 = arith.constant 0 : index
    %c0_2 = arith.constant 0 : index
    %1 = vector.load %arg1[%c0_1, %c0_2] : memref<104x128xf32, #tpu.memory_space<vmem>>, vector<1x128xf32>
    %c8 = arith.constant 8 : index
    %c0_3 = arith.constant 0 : index
    %2 = vector.load %arg1[%c8, %c0_3] : memref<104x128xf32, #tpu.memory_space<vmem>>, vector<8x128xf32>
    %c32 = arith.constant 32 : index
    %c0_4 = arith.constant 0 : index
    %3 = vector.load %arg1[%c32, %c0_4] : memref<104x128xf32, #tpu.memory_space<vmem>>, vector<8x128xf32>
    %cst = arith.constant 0.000000e+00 : f32
    %4 = vector.broadcast %cst : f32 to vector<8x128xf32>
    %5 = arith.subf %4, %3 : vector<8x128xf32>
    %6 = math.exp %5 : vector<8x128xf32>
    %7 = arith.subf %0, %2 : vector<8x128xf32>
    %8 = arith.mulf %7, %6 : vector<8x128xf32>
    %9 = arith.mulf %7, %8 : vector<8x128xf32>
    %cst_5 = arith.constant dense<0.000000e+00> : vector<128xf32>
    %10 = vector.multi_reduction <add>, %9, %cst_5 [0] : vector<8x128xf32> to vector<128xf32>
    %11 = vector.shape_cast %10 : vector<128xf32> to vector<1x128xf32>
    %cst_6 = arith.constant dense<0.000000e+00> : vector<128xf32>
    %12 = vector.multi_reduction <add>, %3, %cst_6 [0] : vector<8x128xf32> to vector<128xf32>
    %13 = vector.shape_cast %12 : vector<128xf32> to vector<1x128xf32>
    %c56 = arith.constant 56 : index
    %c0_7 = arith.constant 0 : index
    %14 = vector.load %arg1[%c56, %c0_7] : memref<104x128xf32, #tpu.memory_space<vmem>>, vector<8x128xf32>
    %c64 = arith.constant 64 : index
    %c0_8 = arith.constant 0 : index
    %15 = vector.load %arg1[%c64, %c0_8] : memref<104x128xf32, #tpu.memory_space<vmem>>, vector<8x128xf32>
    %16 = arith.mulf %14, %6 : vector<8x128xf32>
    %17 = arith.mulf %15, %6 : vector<8x128xf32>
    %18 = arith.mulf %14, %8 : vector<8x128xf32>
    %cst_9 = arith.constant dense<0.000000e+00> : vector<128xf32>
    %19 = vector.multi_reduction <add>, %18, %cst_9 [0] : vector<8x128xf32> to vector<128xf32>
    %20 = vector.shape_cast %19 : vector<128xf32> to vector<1x128xf32>
    %21 = arith.mulf %15, %8 : vector<8x128xf32>
    %cst_10 = arith.constant dense<0.000000e+00> : vector<128xf32>
    %22 = vector.multi_reduction <add>, %21, %cst_10 [0] : vector<8x128xf32> to vector<128xf32>
    %23 = vector.shape_cast %22 : vector<128xf32> to vector<1x128xf32>
    %24 = arith.mulf %16, %14 : vector<8x128xf32>
    %cst_11 = arith.constant dense<0.000000e+00> : vector<128xf32>
    %25 = vector.multi_reduction <add>, %24, %cst_11 [0] : vector<8x128xf32> to vector<128xf32>
    %26 = vector.shape_cast %25 : vector<128xf32> to vector<1x128xf32>
    %cst_12 = arith.constant 1.000000e+00 : f32
    %27 = vector.broadcast %cst_12 : f32 to vector<1x128xf32>
    %28 = arith.addf %26, %27 : vector<1x128xf32>
    %29 = arith.mulf %17, %14 : vector<8x128xf32>
    %cst_13 = arith.constant dense<0.000000e+00> : vector<128xf32>
    %30 = vector.multi_reduction <add>, %29, %cst_13 [0] : vector<8x128xf32> to vector<128xf32>
    %31 = vector.shape_cast %30 : vector<128xf32> to vector<1x128xf32>
    %32 = arith.mulf %17, %15 : vector<8x128xf32>
    %cst_14 = arith.constant dense<0.000000e+00> : vector<128xf32>
    %33 = vector.multi_reduction <add>, %32, %cst_14 [0] : vector<8x128xf32> to vector<128xf32>
    %34 = vector.shape_cast %33 : vector<128xf32> to vector<1x128xf32>
    %cst_15 = arith.constant 1.000000e+00 : f32
    %35 = vector.broadcast %cst_15 : f32 to vector<1x128xf32>
    %36 = arith.addf %34, %35 : vector<1x128xf32>
    %37 = math.rsqrt %28 : vector<1x128xf32>
    %38 = math.log %28 : vector<1x128xf32>
    %39 = arith.mulf %31, %37 : vector<1x128xf32>
    %40 = arith.mulf %39, %39 : vector<1x128xf32>
    %41 = arith.subf %36, %40 : vector<1x128xf32>
    %42 = math.rsqrt %41 : vector<1x128xf32>
    %43 = math.log %41 : vector<1x128xf32>
    %44 = arith.addf %38, %43 : vector<1x128xf32>
    %45 = arith.mulf %20, %37 : vector<1x128xf32>
    %46 = arith.mulf %45, %45 : vector<1x128xf32>
    %47 = arith.mulf %39, %45 : vector<1x128xf32>
    %48 = arith.subf %23, %47 : vector<1x128xf32>
    %49 = arith.mulf %48, %42 : vector<1x128xf32>
    %50 = arith.mulf %49, %49 : vector<1x128xf32>
    %51 = arith.addf %46, %50 : vector<1x128xf32>
    %52 = arith.subf %11, %51 : vector<1x128xf32>
    %53 = arith.addf %44, %13 : vector<1x128xf32>
    %cst_16 = arith.constant 14.7030163 : f32
    %54 = vector.broadcast %cst_16 : f32 to vector<1x128xf32>
    %55 = arith.addf %54, %53 : vector<1x128xf32>
    %56 = arith.addf %55, %52 : vector<1x128xf32>
    %cst_17 = arith.constant -5.000000e-01 : f32
    %57 = vector.broadcast %cst_17 : f32 to vector<1x128xf32>
    %58 = arith.mulf %57, %56 : vector<1x128xf32>
    %59 = arith.addf %1, %58 : vector<1x128xf32>
    %c1 = arith.constant 1 : index
    %c0_18 = arith.constant 0 : index
    %60 = vector.load %arg1[%c1, %c0_18] : memref<104x128xf32, #tpu.memory_space<vmem>>, vector<1x128xf32>
    %c16 = arith.constant 16 : index
    %c0_19 = arith.constant 0 : index
    %61 = vector.load %arg1[%c16, %c0_19] : memref<104x128xf32, #tpu.memory_space<vmem>>, vector<8x128xf32>
    %c40 = arith.constant 40 : index
    %c0_20 = arith.constant 0 : index
    %62 = vector.load %arg1[%c40, %c0_20] : memref<104x128xf32, #tpu.memory_space<vmem>>, vector<8x128xf32>
    %cst_21 = arith.constant 0.000000e+00 : f32
    %63 = vector.broadcast %cst_21 : f32 to vector<8x128xf32>
    %64 = arith.subf %63, %62 : vector<8x128xf32>
    %65 = math.exp %64 : vector<8x128xf32>
    %66 = arith.subf %0, %61 : vector<8x128xf32>
    %67 = arith.mulf %66, %65 : vector<8x128xf32>
    %68 = arith.mulf %66, %67 : vector<8x128xf32>
    %cst_22 = arith.constant dense<0.000000e+00> : vector<128xf32>
    %69 = vector.multi_reduction <add>, %68, %cst_22 [0] : vector<8x128xf32> to vector<128xf32>
    %70 = vector.shape_cast %69 : vector<128xf32> to vector<1x128xf32>
    %cst_23 = arith.constant dense<0.000000e+00> : vector<128xf32>
    %71 = vector.multi_reduction <add>, %62, %cst_23 [0] : vector<8x128xf32> to vector<128xf32>
    %72 = vector.shape_cast %71 : vector<128xf32> to vector<1x128xf32>
    %c72 = arith.constant 72 : index
    %c0_24 = arith.constant 0 : index
    %73 = vector.load %arg1[%c72, %c0_24] : memref<104x128xf32, #tpu.memory_space<vmem>>, vector<8x128xf32>
    %c80 = arith.constant 80 : index
    %c0_25 = arith.constant 0 : index
    %74 = vector.load %arg1[%c80, %c0_25] : memref<104x128xf32, #tpu.memory_space<vmem>>, vector<8x128xf32>
    %75 = arith.mulf %73, %65 : vector<8x128xf32>
    %76 = arith.mulf %74, %65 : vector<8x128xf32>
    %77 = arith.mulf %73, %67 : vector<8x128xf32>
    %cst_26 = arith.constant dense<0.000000e+00> : vector<128xf32>
    %78 = vector.multi_reduction <add>, %77, %cst_26 [0] : vector<8x128xf32> to vector<128xf32>
    %79 = vector.shape_cast %78 : vector<128xf32> to vector<1x128xf32>
    %80 = arith.mulf %74, %67 : vector<8x128xf32>
    %cst_27 = arith.constant dense<0.000000e+00> : vector<128xf32>
    %81 = vector.multi_reduction <add>, %80, %cst_27 [0] : vector<8x128xf32> to vector<128xf32>
    %82 = vector.shape_cast %81 : vector<128xf32> to vector<1x128xf32>
    %83 = arith.mulf %75, %73 : vector<8x128xf32>
    %cst_28 = arith.constant dense<0.000000e+00> : vector<128xf32>
    %84 = vector.multi_reduction <add>, %83, %cst_28 [0] : vector<8x128xf32> to vector<128xf32>
    %85 = vector.shape_cast %84 : vector<128xf32> to vector<1x128xf32>
    %cst_29 = arith.constant 1.000000e+00 : f32
    %86 = vector.broadcast %cst_29 : f32 to vector<1x128xf32>
    %87 = arith.addf %85, %86 : vector<1x128xf32>
    %88 = arith.mulf %76, %73 : vector<8x128xf32>
    %cst_30 = arith.constant dense<0.000000e+00> : vector<128xf32>
    %89 = vector.multi_reduction <add>, %88, %cst_30 [0] : vector<8x128xf32> to vector<128xf32>
    %90 = vector.shape_cast %89 : vector<128xf32> to vector<1x128xf32>
    %91 = arith.mulf %76, %74 : vector<8x128xf32>
    %cst_31 = arith.constant dense<0.000000e+00> : vector<128xf32>
    %92 = vector.multi_reduction <add>, %91, %cst_31 [0] : vector<8x128xf32> to vector<128xf32>
    %93 = vector.shape_cast %92 : vector<128xf32> to vector<1x128xf32>
    %cst_32 = arith.constant 1.000000e+00 : f32
    %94 = vector.broadcast %cst_32 : f32 to vector<1x128xf32>
    %95 = arith.addf %93, %94 : vector<1x128xf32>
    %96 = math.rsqrt %87 : vector<1x128xf32>
    %97 = math.log %87 : vector<1x128xf32>
    %98 = arith.mulf %90, %96 : vector<1x128xf32>
    %99 = arith.mulf %98, %98 : vector<1x128xf32>
    %100 = arith.subf %95, %99 : vector<1x128xf32>
    %101 = math.rsqrt %100 : vector<1x128xf32>
    %102 = math.log %100 : vector<1x128xf32>
    %103 = arith.addf %97, %102 : vector<1x128xf32>
    %104 = arith.mulf %79, %96 : vector<1x128xf32>
    %105 = arith.mulf %104, %104 : vector<1x128xf32>
    %106 = arith.mulf %98, %104 : vector<1x128xf32>
    %107 = arith.subf %82, %106 : vector<1x128xf32>
    %108 = arith.mulf %107, %101 : vector<1x128xf32>
    %109 = arith.mulf %108, %108 : vector<1x128xf32>
    %110 = arith.addf %105, %109 : vector<1x128xf32>
    %111 = arith.subf %70, %110 : vector<1x128xf32>
    %112 = arith.addf %103, %72 : vector<1x128xf32>
    %cst_33 = arith.constant 14.7030163 : f32
    %113 = vector.broadcast %cst_33 : f32 to vector<1x128xf32>
    %114 = arith.addf %113, %112 : vector<1x128xf32>
    %115 = arith.addf %114, %111 : vector<1x128xf32>
    %cst_34 = arith.constant -5.000000e-01 : f32
    %116 = vector.broadcast %cst_34 : f32 to vector<1x128xf32>
    %117 = arith.mulf %116, %115 : vector<1x128xf32>
    %118 = arith.addf %60, %117 : vector<1x128xf32>
    %c2 = arith.constant 2 : index
    %c0_35 = arith.constant 0 : index
    %119 = vector.load %arg1[%c2, %c0_35] : memref<104x128xf32, #tpu.memory_space<vmem>>, vector<1x128xf32>
    %c24 = arith.constant 24 : index
    %c0_36 = arith.constant 0 : index
    %120 = vector.load %arg1[%c24, %c0_36] : memref<104x128xf32, #tpu.memory_space<vmem>>, vector<8x128xf32>
    %c48 = arith.constant 48 : index
    %c0_37 = arith.constant 0 : index
    %121 = vector.load %arg1[%c48, %c0_37] : memref<104x128xf32, #tpu.memory_space<vmem>>, vector<8x128xf32>
    %cst_38 = arith.constant 0.000000e+00 : f32
    %122 = vector.broadcast %cst_38 : f32 to vector<8x128xf32>
    %123 = arith.subf %122, %121 : vector<8x128xf32>
    %124 = math.exp %123 : vector<8x128xf32>
    %125 = arith.subf %0, %120 : vector<8x128xf32>
    %126 = arith.mulf %125, %124 : vector<8x128xf32>
    %127 = arith.mulf %125, %126 : vector<8x128xf32>
    %cst_39 = arith.constant dense<0.000000e+00> : vector<128xf32>
    %128 = vector.multi_reduction <add>, %127, %cst_39 [0] : vector<8x128xf32> to vector<128xf32>
    %129 = vector.shape_cast %128 : vector<128xf32> to vector<1x128xf32>
    %cst_40 = arith.constant dense<0.000000e+00> : vector<128xf32>
    %130 = vector.multi_reduction <add>, %121, %cst_40 [0] : vector<8x128xf32> to vector<128xf32>
    %131 = vector.shape_cast %130 : vector<128xf32> to vector<1x128xf32>
    %c88 = arith.constant 88 : index
    %c0_41 = arith.constant 0 : index
    %132 = vector.load %arg1[%c88, %c0_41] : memref<104x128xf32, #tpu.memory_space<vmem>>, vector<8x128xf32>
    %c96 = arith.constant 96 : index
    %c0_42 = arith.constant 0 : index
    %133 = vector.load %arg1[%c96, %c0_42] : memref<104x128xf32, #tpu.memory_space<vmem>>, vector<8x128xf32>
    %134 = arith.mulf %132, %124 : vector<8x128xf32>
    %135 = arith.mulf %133, %124 : vector<8x128xf32>
    %136 = arith.mulf %132, %126 : vector<8x128xf32>
    %cst_43 = arith.constant dense<0.000000e+00> : vector<128xf32>
    %137 = vector.multi_reduction <add>, %136, %cst_43 [0] : vector<8x128xf32> to vector<128xf32>
    %138 = vector.shape_cast %137 : vector<128xf32> to vector<1x128xf32>
    %139 = arith.mulf %133, %126 : vector<8x128xf32>
    %cst_44 = arith.constant dense<0.000000e+00> : vector<128xf32>
    %140 = vector.multi_reduction <add>, %139, %cst_44 [0] : vector<8x128xf32> to vector<128xf32>
    %141 = vector.shape_cast %140 : vector<128xf32> to vector<1x128xf32>
    %142 = arith.mulf %134, %132 : vector<8x128xf32>
    %cst_45 = arith.constant dense<0.000000e+00> : vector<128xf32>
    %143 = vector.multi_reduction <add>, %142, %cst_45 [0] : vector<8x128xf32> to vector<128xf32>
    %144 = vector.shape_cast %143 : vector<128xf32> to vector<1x128xf32>
    %cst_46 = arith.constant 1.000000e+00 : f32
    %145 = vector.broadcast %cst_46 : f32 to vector<1x128xf32>
    %146 = arith.addf %144, %145 : vector<1x128xf32>
    %147 = arith.mulf %135, %132 : vector<8x128xf32>
    %cst_47 = arith.constant dense<0.000000e+00> : vector<128xf32>
    %148 = vector.multi_reduction <add>, %147, %cst_47 [0] : vector<8x128xf32> to vector<128xf32>
    %149 = vector.shape_cast %148 : vector<128xf32> to vector<1x128xf32>
    %150 = arith.mulf %135, %133 : vector<8x128xf32>
    %cst_48 = arith.constant dense<0.000000e+00> : vector<128xf32>
    %151 = vector.multi_reduction <add>, %150, %cst_48 [0] : vector<8x128xf32> to vector<128xf32>
    %152 = vector.shape_cast %151 : vector<128xf32> to vector<1x128xf32>
    %cst_49 = arith.constant 1.000000e+00 : f32
    %153 = vector.broadcast %cst_49 : f32 to vector<1x128xf32>
    %154 = arith.addf %152, %153 : vector<1x128xf32>
    %155 = math.rsqrt %146 : vector<1x128xf32>
    %156 = math.log %146 : vector<1x128xf32>
    %157 = arith.mulf %149, %155 : vector<1x128xf32>
    %158 = arith.mulf %157, %157 : vector<1x128xf32>
    %159 = arith.subf %154, %158 : vector<1x128xf32>
    %160 = math.rsqrt %159 : vector<1x128xf32>
    %161 = math.log %159 : vector<1x128xf32>
    %162 = arith.addf %156, %161 : vector<1x128xf32>
    %163 = arith.mulf %138, %155 : vector<1x128xf32>
    %164 = arith.mulf %163, %163 : vector<1x128xf32>
    %165 = arith.mulf %157, %163 : vector<1x128xf32>
    %166 = arith.subf %141, %165 : vector<1x128xf32>
    %167 = arith.mulf %166, %160 : vector<1x128xf32>
    %168 = arith.mulf %167, %167 : vector<1x128xf32>
    %169 = arith.addf %164, %168 : vector<1x128xf32>
    %170 = arith.subf %129, %169 : vector<1x128xf32>
    %171 = arith.addf %162, %131 : vector<1x128xf32>
    %cst_50 = arith.constant 14.7030163 : f32
    %172 = vector.broadcast %cst_50 : f32 to vector<1x128xf32>
    %173 = arith.addf %172, %171 : vector<1x128xf32>
    %174 = arith.addf %173, %170 : vector<1x128xf32>
    %cst_51 = arith.constant -5.000000e-01 : f32
    %175 = vector.broadcast %cst_51 : f32 to vector<1x128xf32>
    %176 = arith.mulf %175, %174 : vector<1x128xf32>
    %177 = arith.addf %119, %176 : vector<1x128xf32>
    %178 = arith.maximumf %1, %60 : vector<1x128xf32>
    %179 = arith.maximumf %178, %119 : vector<1x128xf32>
    %180 = arith.subf %1, %179 : vector<1x128xf32>
    %181 = math.exp %180 : vector<1x128xf32>
    %182 = arith.subf %60, %179 : vector<1x128xf32>
    %183 = math.exp %182 : vector<1x128xf32>
    %184 = arith.addf %181, %183 : vector<1x128xf32>
    %185 = arith.subf %119, %179 : vector<1x128xf32>
    %186 = math.exp %185 : vector<1x128xf32>
    %187 = arith.addf %184, %186 : vector<1x128xf32>
    %188 = math.log %187 : vector<1x128xf32>
    %189 = arith.addf %179, %188 : vector<1x128xf32>
    %190 = arith.maximumf %59, %118 : vector<1x128xf32>
    %191 = arith.maximumf %190, %177 : vector<1x128xf32>
    %192 = arith.subf %59, %191 : vector<1x128xf32>
    %193 = math.exp %192 : vector<1x128xf32>
    %194 = arith.subf %118, %191 : vector<1x128xf32>
    %195 = math.exp %194 : vector<1x128xf32>
    %196 = arith.addf %193, %195 : vector<1x128xf32>
    %197 = arith.subf %177, %191 : vector<1x128xf32>
    %198 = math.exp %197 : vector<1x128xf32>
    %199 = arith.addf %196, %198 : vector<1x128xf32>
    %200 = math.log %199 : vector<1x128xf32>
    %201 = arith.addf %191, %200 : vector<1x128xf32>
    %202 = arith.subf %189, %201 : vector<1x128xf32>
    %c0_52 = arith.constant 0 : index
    %c0_53 = arith.constant 0 : index
    %203 = vector.load %arg3[%c0_52, %c0_53] : memref<1x128xf32, #tpu.memory_space<vmem>>, vector<1x128xf32>
    tpu.vector_store %arg3[%c0_52, %c0_53], %202 {strides = array<i32>} : memref<1x128xf32, #tpu.memory_space<vmem>>, vector<1x128xf32>,
    return
  }
  func.func @transform_0(%arg0: i32) -> (i32, i32) {
    %c0_i32 = arith.constant 0 : i32
    %c0_i32_0 = arith.constant 0 : i32
    return %c0_i32, %arg0 : i32, i32
  }
  func.func @transform_1(%arg0: i32) -> (i32, i32) {
    %c0_i32 = arith.constant 0 : i32
    %c0_i32_0 = arith.constant 0 : i32
    return %c0_i32, %arg0 : i32, i32
  }
  func.func @transform_2(%arg0: i32) -> (i32, i32) {
    %c0_i32 = arith.constant 0 : i32
    %c0_i32_0 = arith.constant 0 : i32
    return %c0_i32, %arg0 : i32, i32
  }
}

</mosaic_0001>

<llo_original>
// kernel: tpu_custom_call.1
$region0: #{tpu_custom_call.1}
  #allocation0 [shape = 'u32[]', space=smem, size = 0x4, offset = 0x4, fixed_abs, tag = 'smem constant byte address 0x4 - core index']
  #allocation1 [shape = 'u32[144,128]{1,0:T(1,128)}', space=vmem, size = 0x12000, scoped, tag = 'internal scratch']
  %s0 = inlined_call_operand.hbm [shape: f32[104,128], index: 0, kind: input, shape index: {}]
  %s1 = inlined_call_operand.hbm [shape: f32[8,128], index: 1, kind: input, shape index: {}]
  %s2 = inlined_call_operand.hbm [shape: f32[1,128], index: 2, kind: output, shape index: {}]
  %s3 = sld [smem:[#allocation0]]
  $region26: #{tpu_custom_call.1} parent=0
    _
  %s5 = ssub.s32 1, %s3
  %s6 = scalar_select 0, %s5, %s3
  $region1: #{tpu_custom_call.1} parent=0
    #allocation2 [shape = 'u8[53248]{0}', space=vmem, size = 0xd000, scoped, tag = 'input window, operand 0, single buffered']
    #allocation3 [shape = 's32[1]{0}', space=sflag, size = 0x4, scoped, tag = 'scoped memory for tpu_custom_call.1']
    #allocation4 [shape = 's32[1]{0}', space=sflag, size = 0x4, scoped, tag = 'scoped memory for tpu_custom_call.1']
    #allocation5 [shape = 'u8[4096]{0}', space=vmem, size = 0x1000, scoped, tag = 'input window, operand 1, single buffered']
    #allocation6 [shape = 's32[1]{0}', space=sflag, size = 0x4, scoped, tag = 'scoped memory for tpu_custom_call.1']
    #allocation7 [shape = 'u8[512]{0}', space=vmem, size = 0x400, scoped, tag = 'output window, operand 0, single buffered']
    %7 = vsyncpa [#allocation3], 0
    %8 = vsyncpa [#allocation6], 0
    %9 = vsyncpa [#allocation4], 0
    // Predicated region
    $region2: #{tpu_custom_call.1} parent=1 // pred_check
      _
    $region3: #{tpu_custom_call.1} parent=1 // pred_check_branch
      %11 = sbr.rel (0) target = $region5
    $region4: #{tpu_custom_call.1} parent=1 // pred_region
      %s13 = ssub.s32 1664, 1664
      %14 = vsyncadd [#allocation3], %s13
      %s15 = sshll.u32 [#allocation2], 4
      %s16 = int_to_ptr.vmem [resolvable:$true] %s15
      %21 = dma.hbm_to_vmem [thread:$0]  %s0, 1664, %s16, [#allocation3], 128, 128, 8
    $region5: #{tpu_custom_call.1} parent=1 // pred_fallthru
      _
    // Predicated region
    $region6: #{tpu_custom_call.1} parent=1 // pred_check
      _
    $region7: #{tpu_custom_call.1} parent=1 // pred_check_branch
      %23 = sbr.rel (0) target = $region9
    $region8: #{tpu_custom_call.1} parent=1 // pred_region
      %s25 = ssub.s32 128, 128
      %26 = vsyncadd [#allocation6], %s25
      %s28 = sshll.u32 [#allocation5], 4
      %s29 = int_to_ptr.vmem [resolvable:$true] %s28
      %31 = dma.hbm_to_vmem [thread:$0]  %s1, 128, %s29, [#allocation6]
    $region9: #{tpu_custom_call.1} parent=1 // pred_fallthru
      _
    // Predicated region
    $region10: #{tpu_custom_call.1} parent=1 // pred_check
      _
    $region11: #{tpu_custom_call.1} parent=1 // pred_check_branch
      %33 = sbr.rel (0) target = $region13
    $region12: #{tpu_custom_call.1} parent=1 // pred_region
      %34 = dma.done [#allocation3], 1664
    $region13: #{tpu_custom_call.1} parent=1 // pred_fallthru
      _
    // Predicated region
    $region14: #{tpu_custom_call.1} parent=1 // pred_check
      _
    $region15: #{tpu_custom_call.1} parent=1 // pred_check_branch
      %36 = sbr.rel (0) target = $region17
    $region16: #{tpu_custom_call.1} parent=1 // pred_region
      %37 = dma.done [#allocation6], 128
    $region17: #{tpu_custom_call.1} parent=1 // pred_fallthru
      _
    %v38 = vld [vmem:[#allocation5] sm:$0xff]
    %v39 = vld [vmem:[#allocation2] sm:$0x1]
    %v40 = vld [vmem:[#allocation2 + $0x8] sm:$0xff]
    %v41 = vld [vmem:[#allocation2 + $0x20] sm:$0xff]
    %v42 = vsub.f32 0.0, %v41
    %v43 = vmul.f32 %v42, 1.442695
    %v44 = vpow.pop %v43
    %v45 = vsub.f32 %v38, %v40
    %v46 = vmul.f32 %v45, %v44
    %v47 = vmul.f32 %v45, %v46
    %v48 = vrot.slane %v47, 4
    %v49 = vadd.f32 %v47, %v48
    %v50 = vrot.slane %v49, 2
    %v51 = vadd.f32 %v49, %v50
    %v52 = vrot.slane %v51, 1
    %v53 = vadd.f32 %v51, %v52
    %v54 = vrot.slane %v41, 4
    %v55 = vadd.f32 %v41, %v54
    %v56 = vrot.slane %v55, 2
    %v57 = vadd.f32 %v55, %v56
    %v58 = vrot.slane %v57, 1
    %v59 = vadd.f32 %v57, %v58
    %v60 = vld [vmem:[#allocation2 + $0x38] sm:$0xff]
    %v61 = vld [vmem:[#allocation2 + $0x40] sm:$0xff]
    %v62 = vmul.f32 %v60, %v44
    %v63 = vmul.f32 %v61, %v44
    %v64 = vmul.f32 %v60, %v46
    %v65 = vrot.slane %v64, 4
    %v66 = vadd.f32 %v64, %v65
    %v67 = vrot.slane %v66, 2
    %v68 = vadd.f32 %v66, %v67
    %v69 = vrot.slane %v68, 1
    %v70 = vadd.f32 %v68, %v69
    %v71 = vmul.f32 %v61, %v46
    %v72 = vrot.slane %v71, 4
    %v73 = vadd.f32 %v71, %v72
    %v74 = vrot.slane %v73, 2
    %v75 = vadd.f32 %v73, %v74
    %v76 = vrot.slane %v75, 1
    %v77 = vadd.f32 %v75, %v76
    %v78 = vmul.f32 %v62, %v60
    %v79 = vrot.slane %v78, 4
    %v80 = vadd.f32 %v78, %v79
    %v81 = vrot.slane %v80, 2
    %v82 = vadd.f32 %v80, %v81
    %v83 = vrot.slane %v82, 1
    %v84 = vadd.f32 %v82, %v83
    %v85 = vadd.f32 %v84, 1.0
    %v86 = vmul.f32 %v63, %v60
    %v87 = vrot.slane %v86, 4
    %v88 = vadd.f32 %v86, %v87
    %v89 = vrot.slane %v88, 2
    %v90 = vadd.f32 %v88, %v89
    %v91 = vrot.slane %v90, 1
    %v92 = vadd.f32 %v90, %v91
    %v93 = vmul.f32 %v63, %v61
    %v94 = vrot.slane %v93, 4
    %v95 = vadd.f32 %v93, %v94
    %v96 = vrot.slane %v95, 2
    %v97 = vadd.f32 %v95, %v96
    %v98 = vrot.slane %v97, 1
    %v99 = vadd.f32 %v97, %v98
    %v100 = vadd.f32 %v99, 1.0
    %v101 = vrsqrt.pop %v85
    %v102 = vlog2.pop %v85
    %v103 = vmul.f32 %v102, 0.6931472
    %v104 = vmul.f32 %v92, %v101
    %v105 = vmul.f32 %v104, %v104
    %v106 = vsub.f32 %v100, %v105
    %v107 = vrsqrt.pop %v106
    %v108 = vlog2.pop %v106
    %v109 = vmul.f32 %v108, 0.6931472
    %v110 = vadd.f32 %v103, %v109
    %v111 = vmul.f32 %v70, %v101
    %v112 = vmul.f32 %v111, %v111
    %v113 = vmul.f32 %v104, %v111
    %v114 = vsub.f32 %v77, %v113
    %v115 = vmul.f32 %v114, %v107
    %v116 = vmul.f32 %v115, %v115
    %v117 = vadd.f32 %v112, %v116
    %v118 = vsub.f32 %v53, %v117
    %v119 = vadd.f32 %v110, %v59
    %v120 = vadd.f32 %v119, 14.703016
    %v121 = vadd.f32 %v120, %v118
    %v122 = vmul.f32 %v121, -0.5
    %v123 = vadd.f32 %v39, %v122
    %v124 = vld [vmem:[#allocation2 + $0x1] sm:$0x1]
    %v125 = vld [vmem:[#allocation2 + $0x10] sm:$0xff]
    %v126 = vld [vmem:[#allocation2 + $0x28] sm:$0xff]
    %v127 = vsub.f32 0.0, %v126
    %v128 = vmul.f32 %v127, 1.442695
    %v129 = vpow.pop %v128
    %v130 = vsub.f32 %v38, %v125
    %v131 = vmul.f32 %v130, %v129
    %v132 = vmul.f32 %v130, %v131
    %v133 = vrot.slane %v132, 4
    %v134 = vadd.f32 %v132, %v133
    %v135 = vrot.slane %v134, 2
    %v136 = vadd.f32 %v134, %v135
    %v137 = vrot.slane %v136, 1
    %v138 = vadd.f32 %v136, %v137
    %v139 = vrot.slane %v126, 4
    %v140 = vadd.f32 %v126, %v139
    %v141 = vrot.slane %v140, 2
    %v142 = vadd.f32 %v140, %v141
    %v143 = vrot.slane %v142, 1
    %v144 = vadd.f32 %v142, %v143
    %v145 = vld [vmem:[#allocation2 + $0x48] sm:$0xff]
    %v146 = vld [vmem:[#allocation2 + $0x50] sm:$0xff]
    %v147 = vmul.f32 %v145, %v129
    %v148 = vmul.f32 %v146, %v129
    %v149 = vmul.f32 %v145, %v131
    %v150 = vrot.slane %v149, 4
    %v151 = vadd.f32 %v149, %v150
    %v152 = vrot.slane %v151, 2
    %v153 = vadd.f32 %v151, %v152
    %v154 = vrot.slane %v153, 1
    %v155 = vadd.f32 %v153, %v154
    %v156 = vmul.f32 %v146, %v131
    %v157 = vrot.slane %v156, 4
    %v158 = vadd.f32 %v156, %v157
    %v159 = vrot.slane %v158, 2
    %v160 = vadd.f32 %v158, %v159
    %v161 = vrot.slane %v160, 1
    %v162 = vadd.f32 %v160, %v161
    %v163 = vmul.f32 %v147, %v145
    %v164 = vrot.slane %v163, 4
    %v165 = vadd.f32 %v163, %v164
    %v166 = vrot.slane %v165, 2
    %v167 = vadd.f32 %v165, %v166
    %v168 = vrot.slane %v167, 1
    %v169 = vadd.f32 %v167, %v168
    %v170 = vadd.f32 %v169, 1.0
    %v171 = vmul.f32 %v148, %v145
    %v172 = vrot.slane %v171, 4
    %v173 = vadd.f32 %v171, %v172
    %v174 = vrot.slane %v173, 2
    %v175 = vadd.f32 %v173, %v174
    %v176 = vrot.slane %v175, 1
    %v177 = vadd.f32 %v175, %v176
    %v178 = vmul.f32 %v148, %v146
    %v179 = vrot.slane %v178, 4
    %v180 = vadd.f32 %v178, %v179
    %v181 = vrot.slane %v180, 2
    %v182 = vadd.f32 %v180, %v181
    %v183 = vrot.slane %v182, 1
    %v184 = vadd.f32 %v182, %v183
    %v185 = vadd.f32 %v184, 1.0
    %v186 = vrsqrt.pop %v170
    %v187 = vlog2.pop %v170
    %v188 = vmul.f32 %v187, 0.6931472
    %v189 = vmul.f32 %v177, %v186
    %v190 = vmul.f32 %v189, %v189
    %v191 = vsub.f32 %v185, %v190
    %v192 = vrsqrt.pop %v191
    %v193 = vlog2.pop %v191
    %v194 = vmul.f32 %v193, 0.6931472
    %v195 = vadd.f32 %v188, %v194
    %v196 = vmul.f32 %v155, %v186
    %v197 = vmul.f32 %v196, %v196
    %v198 = vmul.f32 %v189, %v196
    %v199 = vsub.f32 %v162, %v198
    %v200 = vmul.f32 %v199, %v192
    %v201 = vmul.f32 %v200, %v200
    %v202 = vadd.f32 %v197, %v201
    %v203 = vsub.f32 %v138, %v202
    %v204 = vadd.f32 %v195, %v144
    %v205 = vadd.f32 %v204, 14.703016
    %v206 = vadd.f32 %v205, %v203
    %v207 = vmul.f32 %v206, -0.5
    %v208 = vadd.f32 %v124, %v207
    %v209 = vld [vmem:[#allocation2 + $0x2] sm:$0x1]
    %v210 = vld [vmem:[#allocation2 + $0x18] sm:$0xff]
    %v211 = vld [vmem:[#allocation2 + $0x30] sm:$0xff]
    %v212 = vsub.f32 0.0, %v211
    %v213 = vmul.f32 %v212, 1.442695
    %v214 = vpow.pop %v213
    %v215 = vsub.f32 %v38, %v210
    %v216 = vmul.f32 %v215, %v214
    %v217 = vmul.f32 %v215, %v216
    %v218 = vrot.slane %v217, 4
    %v219 = vadd.f32 %v217, %v218
    %v220 = vrot.slane %v219, 2
    %v221 = vadd.f32 %v219, %v220
    %v222 = vrot.slane %v221, 1
    %v223 = vadd.f32 %v221, %v222
    %v224 = vrot.slane %v211, 4
    %v225 = vadd.f32 %v211, %v224
    %v226 = vrot.slane %v225, 2
    %v227 = vadd.f32 %v225, %v226
    %v228 = vrot.slane %v227, 1
    %v229 = vadd.f32 %v227, %v228
    %v230 = vld [vmem:[#allocation2 + $0x58] sm:$0xff]
    %v231 = vld [vmem:[#allocation2 + $0x60] sm:$0xff]
    %v232 = vmul.f32 %v230, %v214
    %v233 = vmul.f32 %v231, %v214
    %v234 = vmul.f32 %v230, %v216
    %v235 = vrot.slane %v234, 4
    %v236 = vadd.f32 %v234, %v235
    %v237 = vrot.slane %v236, 2
    %v238 = vadd.f32 %v236, %v237
    %v239 = vrot.slane %v238, 1
    %v240 = vadd.f32 %v238, %v239
    %v241 = vmul.f32 %v231, %v216
    %v242 = vrot.slane %v241, 4
    %v243 = vadd.f32 %v241, %v242
    %v244 = vrot.slane %v243, 2
    %v245 = vadd.f32 %v243, %v244
    %v246 = vrot.slane %v245, 1
    %v247 = vadd.f32 %v245, %v246
    %v248 = vmul.f32 %v232, %v230
    %v249 = vrot.slane %v248, 4
    %v250 = vadd.f32 %v248, %v249
    %v251 = vrot.slane %v250, 2
    %v252 = vadd.f32 %v250, %v251
    %v253 = vrot.slane %v252, 1
    %v254 = vadd.f32 %v252, %v253
    %v255 = vadd.f32 %v254, 1.0
    %v256 = vmul.f32 %v233, %v230
    %v257 = vrot.slane %v256, 4
    %v258 = vadd.f32 %v256, %v257
    %v259 = vrot.slane %v258, 2
    %v260 = vadd.f32 %v258, %v259
    %v261 = vrot.slane %v260, 1
    %v262 = vadd.f32 %v260, %v261
    %v263 = vmul.f32 %v233, %v231
    %v264 = vrot.slane %v263, 4
    %v265 = vadd.f32 %v263, %v264
    %v266 = vrot.slane %v265, 2
    %v267 = vadd.f32 %v265, %v266
    %v268 = vrot.slane %v267, 1
    %v269 = vadd.f32 %v267, %v268
    %v270 = vadd.f32 %v269, 1.0
    %v271 = vrsqrt.pop %v255
    %v272 = vlog2.pop %v255
    %v273 = vmul.f32 %v272, 0.6931472
    %v274 = vmul.f32 %v262, %v271
    %v275 = vmul.f32 %v274, %v274
    %v276 = vsub.f32 %v270, %v275
    %v277 = vrsqrt.pop %v276
    %v278 = vlog2.pop %v276
    %v279 = vmul.f32 %v278, 0.6931472
    %v280 = vadd.f32 %v273, %v279
    %v281 = vmul.f32 %v240, %v271
    %v282 = vmul.f32 %v281, %v281
    %v283 = vmul.f32 %v274, %v281
    %v284 = vsub.f32 %v247, %v283
    %v285 = vmul.f32 %v284, %v277
    %v286 = vmul.f32 %v285, %v285
    %v287 = vadd.f32 %v282, %v286
    %v288 = vsub.f32 %v223, %v287
    %v289 = vadd.f32 %v280, %v229
    %v290 = vadd.f32 %v289, 14.703016
    %v291 = vadd.f32 %v290, %v288
    %v292 = vmul.f32 %v291, -0.5
    %v293 = vadd.f32 %v209, %v292
    %v294 = vmax.f32 %v39, %v124
    %v295 = vmax.f32 %v294, %v209
    %v296 = vsub.f32 %v39, %v295
    %v297 = vmul.f32 %v296, 1.442695
    %v298 = vpow.pop %v297
    %v299 = vsub.f32 %v124, %v295
    %v300 = vmul.f32 %v299, 1.442695
    %v301 = vpow.pop %v300
    %v302 = vadd.f32 %v298, %v301
    %v303 = vsub.f32 %v209, %v295
    %v304 = vmul.f32 %v303, 1.442695
    %v305 = vpow.pop %v304
    %v306 = vadd.f32 %v302, %v305
    %v307 = vlog2.pop %v306
    %v308 = vmul.f32 %v307, 0.6931472
    %v309 = vadd.f32 %v295, %v308
    %v310 = vmax.f32 %v123, %v208
    %v311 = vmax.f32 %v310, %v293
    %v312 = vsub.f32 %v123, %v311
    %v313 = vmul.f32 %v312, 1.442695
    %v314 = vpow.pop %v313
    %v315 = vsub.f32 %v208, %v311
    %v316 = vmul.f32 %v315, 1.442695
    %v317 = vpow.pop %v316
    %v318 = vadd.f32 %v314, %v317
    %v319 = vsub.f32 %v293, %v311
    %v320 = vmul.f32 %v319, 1.442695
    %v321 = vpow.pop %v320
    %v322 = vadd.f32 %v318, %v321
    %v323 = vlog2.pop %v322
    %v324 = vmul.f32 %v323, 0.6931472
    %v325 = vadd.f32 %v311, %v324
    %v326 = vsub.f32 %v309, %v325
    %327 = vst [vmem:[#allocation7] sm:$0x1] %v326
    // Predicated region
    $region18: #{tpu_custom_call.1} parent=1 // pred_check
      _
    $region19: #{tpu_custom_call.1} parent=1 // pred_check_branch
      %329 = sbr.rel (0) target = $region21
    $region20: #{tpu_custom_call.1} parent=1 // pred_region
      %s331 = ssub.s32 16, 16
      %332 = vsyncadd [#allocation4], %s331
      %s334 = sshll.u32 [#allocation7], 4
      %s335 = int_to_ptr.vmem [resolvable:$true] %s334
      %337 = dma.vmem_to_hbm [thread:$0]  %s335, 16, %s2, [#allocation4]
    $region21: #{tpu_custom_call.1} parent=1 // pred_fallthru
      _
    // Predicated region
    $region22: #{tpu_custom_call.1} parent=1 // pred_check
      _
    $region23: #{tpu_custom_call.1} parent=1 // pred_check_branch
      %339 = sbr.rel (0) target = $region25
    $region24: #{tpu_custom_call.1} parent=1 // pred_region
      %340 = dma.done [#allocation4], 16
    $region25: #{tpu_custom_call.1} parent=1 // pred_fallthru
      _
    %341 = vsyncpa [#allocation3], 1
    %342 = vsyncpa [#allocation6], 1
    %343 = vsyncpa [#allocation4], 1

</llo_original>
